<compile_context>
chip_gen: v6e
topology: v6e:2x2x1
jax: 0.10.0
libtpu: 0.0.40
codegen_flags: <defaults>
</compile_context>

<pallas_src>
import functools

import jax
import jax.numpy as jnp
from jax.experimental import pallas as pl
from jax.experimental.pallas import tpu as pltpu


HID = 128  # lane-padded hidden width (100/70/40 -> 128)


def _autoencoder_kernel(
    x_ref,
    w1_ref, b1_ref,
    w2_ref, b2_ref,
    w3_ref, b3_ref,
    w4_ref, b4_ref,
    w5_ref, b5_ref,
    w6_ref, b6_ref,
    o_ref,
):
    """Fused forward pass of the whole autoencoder for one batch tile.

    Matmuls hit the MXU in the weights' dtype (f32 or bf16) with f32
    accumulation; tanh goes to the EUP, relu/bias-add to the VPU in f32.
    Activations are carried between layers in the weight dtype (bf16 on
    v6e/v7x; plain f32 on v5e where the casts vanish).  Dropout == identity
    (eval mode).
    """
    act_dtype = w1_ref.dtype  # bf16 on v6e/v7x, f32 on v5e

    def dense(h, w_ref, b_ref):
        # f32 accumulation on the MXU, f32 bias add on the VPU.
        return (
            jnp.dot(h, w_ref[...], preferred_element_type=jnp.float32)
            + b_ref[...]
        )

    x = x_ref[...].astype(act_dtype)

    # ----- encoder -----
    h = jnp.tanh(dense(x, w1_ref, b1_ref)).astype(act_dtype)
    h = jnp.tanh(dense(h, w2_ref, b2_ref)).astype(act_dtype)
    h = dense(h, w3_ref, b3_ref)

    # ----- decoder -----
    h = jnp.maximum(h, 0.0).astype(act_dtype)  # ReLU(inplace=True)
    h = jnp.tanh(dense(h, w4_ref, b4_ref)).astype(act_dtype)
    h = jnp.tanh(dense(h, w5_ref, b5_ref)).astype(act_dtype)
    out = dense(h, w6_ref, b6_ref)

    o_ref[...] = out.astype(o_ref.dtype)


def _round_up(x, m):
    return ((x + m - 1) // m) * m


def _pad_to(a, shape):
    pads = [(0, s - d) for d, s in zip(a.shape, shape)]
    if all(p == (0, 0) for p in pads):
        return a
    return jnp.pad(a, pads)


def _detect_tpu():
    """Best-effort (num TensorCores per chip, VMEM limit to request)."""
    try:
        kind = jax.devices()[0].device_kind.lower()
    except Exception:  # pragma: no cover - defensive
        kind = ""
    if "v7" in kind:
        # 2 TCs, 64 MiB physical VMEM per TC -> leave headroom.
        return 2, 40 * 1024 * 1024
    if "v5" in kind or "v6" in kind:
        # 1 TC, 128 MiB physical VMEM.
        return 1, 96 * 1024 * 1024
    # Unknown: be conservative.
    return 1, 40 * 1024 * 1024


def _choose_tiling(batch, f_in, f_out_pad, *, block_b_cap, num_cores,
                   vmem_limit_bytes):
    """Pick (batch tile, n_steps): large tiles, near-even split, and only
    multiple grid steps when there is a second TensorCore worth feeding."""
    # Per-row VMEM: double-buffered x / out blocks + ~6 (bb,128) intermediates.
    bytes_per_row = 2 * f_in * 4 + 2 * f_out_pad * 4 + 6 * HID * 4
    bb_budget = max(8, (vmem_limit_bytes // 2) // bytes_per_row)
    bb_cap = max(8, (min(block_b_cap, bb_budget) // 8) * 8)

    b8 = _round_up(batch, 8)

    if b8 <= bb_cap:
        if num_cores >= 2 and batch >= 512:
            # v7x: split across both TensorCores when each half is still big.
            bb = _round_up(pl.cdiv(batch, 2), 8)
            return bb, pl.cdiv(batch, bb)
        return b8, 1

    # Batch larger than one tile: near-even split (tiles ~divide the batch).
    n_steps = pl.cdiv(b8, bb_cap)
    if num_cores >= 2 and n_steps % 2 == 1:
        n_steps += 1  # even work split across the two TCs
    bb = min(bb_cap, _round_up(pl.cdiv(batch, n_steps), 8))
    n_steps = pl.cdiv(batch, bb)
    return bb, n_steps


@functools.partial(jax.jit, static_argnames=("block_b",))
def autoencoder_forward(x, params, *, block_b=4096):
    """x: (B, f_in). params: 6 weights w1..w6 (in,out; f32 or bf16) and
    6 biases b1..b6 ((1,out) or (out,); f32)."""
    B, f_in = x.shape
    f_out_pad = _round_up(f_in, 128)

    num_cores, vmem_limit = _detect_tpu()
    bb, n_steps = _choose_tiling(
        B, f_in, f_out_pad,
        block_b_cap=block_b, num_cores=num_cores,
        vmem_limit_bytes=vmem_limit,
    )
    B_pad = n_steps * bb
    if B_pad != B:
        x = jnp.pad(x, ((0, B_pad - B), (0, 0)))

    # Lane-pad hidden dims (100/70/40 -> 128) and the output dim (-> mult of
    # 128) with zeros. Zero columns/rows + zero bias keep results identical.
    dims = [f_in, HID, HID, HID, HID, HID, f_out_pad]
    ws, bs = [], []
    for i in range(1, 7):
        w = params[f"w{i}"]
        b = params[f"b{i}"].reshape(1, -1).astype(jnp.float32)
        ws.append(_pad_to(w, (dims[i - 1], dims[i])))
        bs.append(_pad_to(b, (1, dims[i])))

    # Weights / biases: whole-array, resident in VMEM, not pipelined.
    resident = pl.BlockSpec(memory_space=pltpu.MemorySpace.VMEM)
    in_specs = [pl.BlockSpec((bb, f_in), lambda i: (i, 0))]
    for _ in range(6):
        in_specs.append(resident)  # weight
        in_specs.append(resident)  # bias

    flops = 2 * B_pad * sum(dims[i - 1] * dims[i] for i in range(1, 7))
    transcendentals = 4 * B_pad * HID  # 4 tanh layers at padded width
    bytes_accessed = (
        B_pad * (f_in + f_out_pad) * x.dtype.itemsize
        + sum(int(w.size) * w.dtype.itemsize for w in ws)
        + sum(int(b.size) * 4 for b in bs)
    )

    operands = [x]
    for w, b in zip(ws, bs):
        operands.extend((w, b))

    out = pl.pallas_call(
        _autoencoder_kernel,
        out_shape=jax.ShapeDtypeStruct((B_pad, f_out_pad), x.dtype),
        grid_spec=pltpu.PrefetchScalarGridSpec(
            num_scalar_prefetch=0,
            grid=(n_steps,),
            in_specs=in_specs,
            out_specs=pl.BlockSpec((bb, f_out_pad), lambda i: (i, 0)),
        ),
        compiler_params=pltpu.CompilerParams(
            dimension_semantics=("parallel",),
            vmem_limit_bytes=vmem_limit,
        ),
        cost_estimate=pl.CostEstimate(
            flops=int(flops),
            transcendentals=int(transcendentals),
            bytes_accessed=int(bytes_accessed),
        ),
    )(*operands)

    return out[:B, :f_in]


def init_params(key, f_in, *, weight_dtype=jnp.float32):
    """Init mimicking nn.Linear defaults: U(-1/sqrt(in), 1/sqrt(in)).

    Weights are stored transposed relative to PyTorch, i.e. (in, out), so the
    kernel computes x @ W + b. Biases are stored as 2-D (1, out) f32 tiles.
    On v5e prefer weight_dtype=f32; on v6e/v7x bf16 is MXU-native.
    """
    dims = [
        (f_in, 100),  # encoder Linear(f_in, 100)
        (100, 70),    # encoder Linear(100, 70)
        (70, 40),     # encoder Linear(70, 40)
        (40, 40),     # decoder Linear(40, 40)
        (40, 70),     # decoder Linear(40, 70)
        (70, f_in),   # decoder Linear(70, f_in)
    ]
    params = {}
    for idx, (d_in, d_out) in enumerate(dims, start=1):
        key, kw, kb = jax.random.split(key, 3)
        bound = 1.0 / jnp.sqrt(jnp.float32(d_in))
        params[f"w{idx}"] = jax.random.uniform(
            kw, (d_in, d_out), jnp.float32, minval=-bound, maxval=bound
        ).astype(weight_dtype)
        params[f"b{idx}"] = jax.random.uniform(
            kb, (1, d_out), jnp.float32, minval=-bound, maxval=bound
        )
    return params


def reference_forward(x, params):
    """Plain-JAX f32 reference of the same (eval-mode) forward pass."""
    def dense(h, w, b):
        return h @ w.astype(jnp.float32) + b

    h = jnp.tanh(dense(x, params["w1"], params["b1"]))
    h = jnp.tanh(dense(h, params["w2"], params["b2"]))
    h = dense(h, params["w3"], params["b3"])
    h = jnp.maximum(h, 0.0)
    h = jnp.tanh(dense(h, params["w4"], params["b4"]))
    h = jnp.tanh(dense(h, params["w5"], params["b5"]))
    return dense(h, params["w6"], params["b6"])


if __name__ == "__main__":
    f_in = 32
    batch = 16

    key = jax.random.PRNGKey(0)
    key, kx = jax.random.split(key)
    x = jax.random.normal(kx, (batch, f_in), jnp.float32)

    # --- f32 weights (v5e-friendly path), tight tolerance ---
    params = init_params(key, f_in, weight_dtype=jnp.float32)
    out = jax.block_until_ready(autoencoder_forward(x, params))
    ref = reference_forward(x, params)
    assert out.shape == (batch, f_in), out.shape
    assert jnp.allclose(out, ref, atol=1e-4, rtol=1e-4), float(
        jnp.max(jnp.abs(out - ref))
    )

    # --- odd batch size: exercises the 8-row padding + output slicing ---
    x_odd = x[:13]
    out_odd = jax.block_until_ready(autoencoder_forward(x_odd, params))
    assert out_odd.shape == (13, f_in), out_odd.shape
    assert jnp.allclose(out_odd, ref[:13], atol=1e-4, rtol=1e-4), float(
        jnp.max(jnp.abs(out_odd - ref[:13]))
    )

    # --- bf16 weights (v6e / v7x MXU-native path), looser tolerance vs f32 ref ---
    params_bf16 = {
        k: (v.astype(jnp.bfloat16) if k.startswith("w") else v)
        for k, v in params.items()
    }
    out_bf16 = jax.block_until_ready(autoencoder_forward(x, params_bf16))
    assert out_bf16.shape == (batch, f_in), out_bf16.shape
    assert jnp.allclose(out_bf16, ref, atol=5e-2, rtol=5e-2), float(
        jnp.max(jnp.abs(out_bf16 - ref))
    )

    print("KERNEL_OK")
</pallas_src>

<mosaic_0001>
module attributes {stable_mosaic.version = 11 : i64} {
  func.func @_autoencoder_kernel(%arg0: i32, %arg1: memref<16x32xf32, #tpu.memory_space<vmem>>, %arg2: memref<32x128xf32, #tpu.memory_space<vmem>>, %arg3: memref<1x128xf32, #tpu.memory_space<vmem>>, %arg4: memref<128x128xf32, #tpu.memory_space<vmem>>, %arg5: memref<1x128xf32, #tpu.memory_space<vmem>>, %arg6: memref<128x128xf32, #tpu.memory_space<vmem>>, %arg7: memref<1x128xf32, #tpu.memory_space<vmem>>, %arg8: memref<128x128xf32, #tpu.memory_space<vmem>>, %arg9: memref<1x128xf32, #tpu.memory_space<vmem>>, %arg10: memref<128x128xf32, #tpu.memory_space<vmem>>, %arg11: memref<1x128xf32, #tpu.memory_space<vmem>>, %arg12: memref<128x128xf32, #tpu.memory_space<vmem>>, %arg13: memref<1x128xf32, #tpu.memory_space<vmem>>, %arg14: memref<16x128xf32, #tpu.memory_space<vmem>>) attributes {dimension_semantics = [#tpu.dimension_semantics<parallel>], iteration_bounds = array<i64: 1>, scalar_prefetch = 0 : i64, scratch_operands = 0 : i64, tpu.core_type = #tpu.core_type<tc>, window_params = [{transform_indices = @transform_0, window_bounds = array<i64: 16, 32>}, {pipeline_mode = #tpu.pipeline_mode<synchronous>, transform_indices = @transform_1, window_bounds = array<i64: 32, 128>}, {pipeline_mode = #tpu.pipeline_mode<synchronous>, transform_indices = @transform_2, window_bounds = array<i64: 1, 128>}, {pipeline_mode = #tpu.pipeline_mode<synchronous>, transform_indices = @transform_3, window_bounds = array<i64: 128, 128>}, {pipeline_mode = #tpu.pipeline_mode<synchronous>, transform_indices = @transform_4, window_bounds = array<i64: 1, 128>}, {pipeline_mode = #tpu.pipeline_mode<synchronous>, transform_indices = @transform_5, window_bounds = array<i64: 128, 128>}, {pipeline_mode = #tpu.pipeline_mode<synchronous>, transform_indices = @transform_6, window_bounds = array<i64: 1, 128>}, {pipeline_mode = #tpu.pipeline_mode<synchronous>, transform_indices = @transform_7, window_bounds = array<i64: 128, 128>}, {pipeline_mode = #tpu.pipeline_mode<synchronous>, transform_indices = @transform_8, window_bounds = array<i64: 1, 128>}, {pipeline_mode = #tpu.pipeline_mode<synchronous>, transform_indices = @transform_9, window_bounds = array<i64: 128, 128>}, {pipeline_mode = #tpu.pipeline_mode<synchronous>, transform_indices = @transform_10, window_bounds = array<i64: 1, 128>}, {pipeline_mode = #tpu.pipeline_mode<synchronous>, transform_indices = @transform_11, window_bounds = array<i64: 128, 128>}, {pipeline_mode = #tpu.pipeline_mode<synchronous>, transform_indices = @transform_12, window_bounds = array<i64: 1, 128>}, {transform_indices = @transform_13, window_bounds = array<i64: 16, 128>}]} {
    %c0 = arith.constant 0 : index
    %c0_0 = arith.constant 0 : index
    %0 = vector.load %arg1[%c0, %c0_0] : memref<16x32xf32, #tpu.memory_space<vmem>>, vector<16x32xf32>
    %c0_1 = arith.constant 0 : index
    %c0_2 = arith.constant 0 : index
    %1 = vector.load %arg2[%c0_1, %c0_2] : memref<32x128xf32, #tpu.memory_space<vmem>>, vector<32x128xf32>
    %cst = arith.constant dense<0.000000e+00> : vector<16x128xf32>
    %2 = tpu.matmul %0, %1, %cst {dimension_numbers = #tpu.dot_dimension_numbers<[1], [0], [0], [1], [0, 0, 1, 1], [], []>} : vector<16x32xf32>, vector<32x128xf32>, vector<16x128xf32> -> vector<16x128xf32>
    %c0_3 = arith.constant 0 : index
    %c0_4 = arith.constant 0 : index
    %3 = vector.load %arg3[%c0_3, %c0_4] : memref<1x128xf32, #tpu.memory_space<vmem>>, vector<1x128xf32>
    %4 = vector.broadcast %3 : vector<1x128xf32> to vector<16x128xf32>
    %5 = arith.addf %2, %4 : vector<16x128xf32>
    %6 = math.tanh %5 : vector<16x128xf32>
    %c0_5 = arith.constant 0 : index
    %c0_6 = arith.constant 0 : index
    %7 = vector.load %arg4[%c0_5, %c0_6] : memref<128x128xf32, #tpu.memory_space<vmem>>, vector<128x128xf32>
    %cst_7 = arith.constant dense<0.000000e+00> : vector<16x128xf32>
    %8 = tpu.matmul %6, %7, %cst_7 {dimension_numbers = #tpu.dot_dimension_numbers<[1], [0], [0], [1], [0, 0, 1, 1], [], []>} : vector<16x128xf32>, vector<128x128xf32>, vector<16x128xf32> -> vector<16x128xf32>
    %c0_8 = arith.constant 0 : index
    %c0_9 = arith.constant 0 : index
    %9 = vector.load %arg5[%c0_8, %c0_9] : memref<1x128xf32, #tpu.memory_space<vmem>>, vector<1x128xf32>
    %10 = vector.broadcast %9 : vector<1x128xf32> to vector<16x128xf32>
    %11 = arith.addf %8, %10 : vector<16x128xf32>
    %12 = math.tanh %11 : vector<16x128xf32>
    %c0_10 = arith.constant 0 : index
    %c0_11 = arith.constant 0 : index
    %13 = vector.load %arg6[%c0_10, %c0_11] : memref<128x128xf32, #tpu.memory_space<vmem>>, vector<128x128xf32>
    %cst_12 = arith.constant dense<0.000000e+00> : vector<16x128xf32>
    %14 = tpu.matmul %12, %13, %cst_12 {dimension_numbers = #tpu.dot_dimension_numbers<[1], [0], [0], [1], [0, 0, 1, 1], [], []>} : vector<16x128xf32>, vector<128x128xf32>, vector<16x128xf32> -> vector<16x128xf32>
    %c0_13 = arith.constant 0 : index
    %c0_14 = arith.constant 0 : index
    %15 = vector.load %arg7[%c0_13, %c0_14] : memref<1x128xf32, #tpu.memory_space<vmem>>, vector<1x128xf32>
    %16 = vector.broadcast %15 : vector<1x128xf32> to vector<16x128xf32>
    %17 = arith.addf %14, %16 : vector<16x128xf32>
    %cst_15 = arith.constant 0.000000e+00 : f32
    %18 = vector.broadcast %cst_15 : f32 to vector<16x128xf32>
    %19 = arith.maximumf %17, %18 : vector<16x128xf32>
    %c0_16 = arith.constant 0 : index
    %c0_17 = arith.constant 0 : index
    %20 = vector.load %arg8[%c0_16, %c0_17] : memref<128x128xf32, #tpu.memory_space<vmem>>, vector<128x128xf32>
    %cst_18 = arith.constant dense<0.000000e+00> : vector<16x128xf32>
    %21 = tpu.matmul %19, %20, %cst_18 {dimension_numbers = #tpu.dot_dimension_numbers<[1], [0], [0], [1], [0, 0, 1, 1], [], []>} : vector<16x128xf32>, vector<128x128xf32>, vector<16x128xf32> -> vector<16x128xf32>
    %c0_19 = arith.constant 0 : index
    %c0_20 = arith.constant 0 : index
    %22 = vector.load %arg9[%c0_19, %c0_20] : memref<1x128xf32, #tpu.memory_space<vmem>>, vector<1x128xf32>
    %23 = vector.broadcast %22 : vector<1x128xf32> to vector<16x128xf32>
    %24 = arith.addf %21, %23 : vector<16x128xf32>
    %25 = math.tanh %24 : vector<16x128xf32>
    %c0_21 = arith.constant 0 : index
    %c0_22 = arith.constant 0 : index
    %26 = vector.load %arg10[%c0_21, %c0_22] : memref<128x128xf32, #tpu.memory_space<vmem>>, vector<128x128xf32>
    %cst_23 = arith.constant dense<0.000000e+00> : vector<16x128xf32>
    %27 = tpu.matmul %25, %26, %cst_23 {dimension_numbers = #tpu.dot_dimension_numbers<[1], [0], [0], [1], [0, 0, 1, 1], [], []>} : vector<16x128xf32>, vector<128x128xf32>, vector<16x128xf32> -> vector<16x128xf32>
    %c0_24 = arith.constant 0 : index
    %c0_25 = arith.constant 0 : index
    %28 = vector.load %arg11[%c0_24, %c0_25] : memref<1x128xf32, #tpu.memory_space<vmem>>, vector<1x128xf32>
    %29 = vector.broadcast %28 : vector<1x128xf32> to vector<16x128xf32>
    %30 = arith.addf %27, %29 : vector<16x128xf32>
    %31 = math.tanh %30 : vector<16x128xf32>
    %c0_26 = arith.constant 0 : index
    %c0_27 = arith.constant 0 : index
    %32 = vector.load %arg12[%c0_26, %c0_27] : memref<128x128xf32, #tpu.memory_space<vmem>>, vector<128x128xf32>
    %cst_28 = arith.constant dense<0.000000e+00> : vector<16x128xf32>
    %33 = tpu.matmul %31, %32, %cst_28 {dimension_numbers = #tpu.dot_dimension_numbers<[1], [0], [0], [1], [0, 0, 1, 1], [], []>} : vector<16x128xf32>, vector<128x128xf32>, vector<16x128xf32> -> vector<16x128xf32>
    %c0_29 = arith.constant 0 : index
    %c0_30 = arith.constant 0 : index
    %34 = vector.load %arg13[%c0_29, %c0_30] : memref<1x128xf32, #tpu.memory_space<vmem>>, vector<1x128xf32>
    %35 = vector.broadcast %34 : vector<1x128xf32> to vector<16x128xf32>
    %36 = arith.addf %33, %35 : vector<16x128xf32>
    %c0_31 = arith.constant 0 : index
    %c0_32 = arith.constant 0 : index
    %37 = vector.load %arg14[%c0_31, %c0_32] : memref<16x128xf32, #tpu.memory_space<vmem>>, vector<16x128xf32>
    tpu.vector_store %arg14[%c0_31, %c0_32], %36 {strides = array<i32>} : memref<16x128xf32, #tpu.memory_space<vmem>>, vector<16x128xf32>,
    return
  }
  func.func @transform_0(%arg0: i32) -> (i32, i32) {
    %c0_i32 = arith.constant 0 : i32
    %c0_i32_0 = arith.constant 0 : i32
    return %arg0, %c0_i32 : i32, i32
  }
  func.func @transform_1(%arg0: i32) -> (i32, i32) {
    %c0_i32 = arith.constant 0 : i32
    %c0_i32_0 = arith.constant 0 : i32
    %c0_i32_1 = arith.constant 0 : i32
    return %c0_i32, %c0_i32_0 : i32, i32
  }
  func.func @transform_2(%arg0: i32) -> (i32, i32) {
    %c0_i32 = arith.constant 0 : i32
    %c0_i32_0 = arith.constant 0 : i32
    %c0_i32_1 = arith.constant 0 : i32
    return %c0_i32, %c0_i32_0 : i32, i32
  }
  func.func @transform_3(%arg0: i32) -> (i32, i32) {
    %c0_i32 = arith.constant 0 : i32
    %c0_i32_0 = arith.constant 0 : i32
    %c0_i32_1 = arith.constant 0 : i32
    return %c0_i32, %c0_i32_0 : i32, i32
  }
  func.func @transform_4(%arg0: i32) -> (i32, i32) {
    %c0_i32 = arith.constant 0 : i32
    %c0_i32_0 = arith.constant 0 : i32
    %c0_i32_1 = arith.constant 0 : i32
    return %c0_i32, %c0_i32_0 : i32, i32
  }
  func.func @transform_5(%arg0: i32) -> (i32, i32) {
    %c0_i32 = arith.constant 0 : i32
    %c0_i32_0 = arith.constant 0 : i32
    %c0_i32_1 = arith.constant 0 : i32
    return %c0_i32, %c0_i32_0 : i32, i32
  }
  func.func @transform_6(%arg0: i32) -> (i32, i32) {
    %c0_i32 = arith.constant 0 : i32
    %c0_i32_0 = arith.constant 0 : i32
    %c0_i32_1 = arith.constant 0 : i32
    return %c0_i32, %c0_i32_0 : i32, i32
  }
  func.func @transform_7(%arg0: i32) -> (i32, i32) {
    %c0_i32 = arith.constant 0 : i32
    %c0_i32_0 = arith.constant 0 : i32
    %c0_i32_1 = arith.constant 0 : i32
    return %c0_i32, %c0_i32_0 : i32, i32
  }
  func.func @transform_8(%arg0: i32) -> (i32, i32) {
    %c0_i32 = arith.constant 0 : i32
    %c0_i32_0 = arith.constant 0 : i32
    %c0_i32_1 = arith.constant 0 : i32
    return %c0_i32, %c0_i32_0 : i32, i32
  }
  func.func @transform_9(%arg0: i32) -> (i32, i32) {
    %c0_i32 = arith.constant 0 : i32
    %c0_i32_0 = arith.constant 0 : i32
    %c0_i32_1 = arith.constant 0 : i32
    return %c0_i32, %c0_i32_0 : i32, i32
  }
  func.func @transform_10(%arg0: i32) -> (i32, i32) {
    %c0_i32 = arith.constant 0 : i32
    %c0_i32_0 = arith.constant 0 : i32
    %c0_i32_1 = arith.constant 0 : i32
    return %c0_i32, %c0_i32_0 : i32, i32
  }
  func.func @transform_11(%arg0: i32) -> (i32, i32) {
    %c0_i32 = arith.constant 0 : i32
    %c0_i32_0 = arith.constant 0 : i32
    %c0_i32_1 = arith.constant 0 : i32
    return %c0_i32, %c0_i32_0 : i32, i32
  }
  func.func @transform_12(%arg0: i32) -> (i32, i32) {
    %c0_i32 = arith.constant 0 : i32
    %c0_i32_0 = arith.constant 0 : i32
    %c0_i32_1 = arith.constant 0 : i32
    return %c0_i32, %c0_i32_0 : i32, i32
  }
  func.func @transform_13(%arg0: i32) -> (i32, i32) {
    %c0_i32 = arith.constant 0 : i32
    %c0_i32_0 = arith.constant 0 : i32
    return %arg0, %c0_i32 : i32, i32
  }
}

</mosaic_0001>

<llo_original>
// kernel: autoencoder_forward.1
$region0: #{autoencoder_forward.1}
  #allocation0 [shape = 'u32[]', space=smem, size = 0x4, offset = 0x4, fixed_abs, tag = 'smem constant byte address 0x4 - core index']
  #allocation1 [shape = 'u32[144,128]{1,0:T(1,128)}', space=vmem, size = 0x12000, scoped, tag = 'internal scratch']
  %s0 = inlined_call_operand.vmem [shape: f32[16,32], index: 0, kind: input, shape index: {}]
  %s1 = inlined_call_operand.vmem [shape: f32[32,128], index: 1, kind: input, shape index: {}]
  %s2 = inlined_call_operand.vmem [shape: f32[1,128], index: 2, kind: input, shape index: {}]
  %s3 = inlined_call_operand.vmem [shape: f32[128,128], index: 3, kind: input, shape index: {}]
  %s4 = inlined_call_operand.vmem [shape: f32[1,128], index: 4, kind: input, shape index: {}]
  %s5 = inlined_call_operand.vmem [shape: f32[128,128], index: 5, kind: input, shape index: {}]
  %s6 = inlined_call_operand.vmem [shape: f32[1,128], index: 6, kind: input, shape index: {}]
  %s7 = inlined_call_operand.vmem [shape: f32[128,128], index: 7, kind: input, shape index: {}]
  %s8 = inlined_call_operand.vmem [shape: f32[1,128], index: 8, kind: input, shape index: {}]
  %s9 = inlined_call_operand.vmem [shape: f32[128,128], index: 9, kind: input, shape index: {}]
  %s10 = inlined_call_operand.vmem [shape: f32[1,128], index: 10, kind: input, shape index: {}]
  %s11 = inlined_call_operand.vmem [shape: f32[128,128], index: 11, kind: input, shape index: {}]
  %s12 = inlined_call_operand.vmem [shape: f32[1,128], index: 12, kind: input, shape index: {}]
  %s13 = inlined_call_operand.hbm [shape: f32[16,128], index: 13, kind: output, shape index: {}]
  %s14 = sld [smem:[#allocation0]]
  $region62: #{autoencoder_forward.1} parent=0
    _
  %s16 = ssub.s32 1, %s14
  %s17 = scalar_select 0, %s16, %s14
  $region1: #{autoencoder_forward.1} parent=0
    #allocation2 [shape = 'u8[8192]{0}', space=vmem, size = 0x2000, scoped, tag = 'output window, operand 0, single buffered']
    #allocation3 [shape = 's32[1]{0}', space=sflag, size = 0x4, scoped, tag = 'scoped memory for autoencoder_forward.1']
    %18 = vsyncpa [#allocation3], 0
    // Predicated region
    $region2: #{autoencoder_forward.1} parent=1 // pred_check
      _
    $region3: #{autoencoder_forward.1} parent=1 // pred_check_branch
      %20 = sbr.rel (0) target = $region5
    $region4: #{autoencoder_forward.1} parent=1 // pred_region
      _
    $region5: #{autoencoder_forward.1} parent=1 // pred_fallthru
      _
    // Predicated region
    $region6: #{autoencoder_forward.1} parent=1 // pred_check
      _
    $region7: #{autoencoder_forward.1} parent=1 // pred_check_branch
      %22 = sbr.rel (0) target = $region9
    $region8: #{autoencoder_forward.1} parent=1 // pred_region
      _
    $region9: #{autoencoder_forward.1} parent=1 // pred_fallthru
      _
    // Predicated region
    $region10: #{autoencoder_forward.1} parent=1 // pred_check
      _
    $region11: #{autoencoder_forward.1} parent=1 // pred_check_branch
      %24 = sbr.rel (0) target = $region13
    $region12: #{autoencoder_forward.1} parent=1 // pred_region
      _
    $region13: #{autoencoder_forward.1} parent=1 // pred_fallthru
      _
    // Predicated region
    $region14: #{autoencoder_forward.1} parent=1 // pred_check
      _
    $region15: #{autoencoder_forward.1} parent=1 // pred_check_branch
      %26 = sbr.rel (0) target = $region17
    $region16: #{autoencoder_forward.1} parent=1 // pred_region
      _
    $region17: #{autoencoder_forward.1} parent=1 // pred_fallthru
      _
    // Predicated region
    $region18: #{autoencoder_forward.1} parent=1 // pred_check
      _
    $region19: #{autoencoder_forward.1} parent=1 // pred_check_branch
      %28 = sbr.rel (0) target = $region21
    $region20: #{autoencoder_forward.1} parent=1 // pred_region
      _
    $region21: #{autoencoder_forward.1} parent=1 // pred_fallthru
      _
    // Predicated region
    $region22: #{autoencoder_forward.1} parent=1 // pred_check
      _
    $region23: #{autoencoder_forward.1} parent=1 // pred_check_branch
      %30 = sbr.rel (0) target = $region25
    $region24: #{autoencoder_forward.1} parent=1 // pred_region
      _
    $region25: #{autoencoder_forward.1} parent=1 // pred_fallthru
      _
    // Predicated region
    $region26: #{autoencoder_forward.1} parent=1 // pred_check
      _
    $region27: #{autoencoder_forward.1} parent=1 // pred_check_branch
      %32 = sbr.rel (0) target = $region29
    $region28: #{autoencoder_forward.1} parent=1 // pred_region
      _
    $region29: #{autoencoder_forward.1} parent=1 // pred_fallthru
      _
    // Predicated region
    $region30: #{autoencoder_forward.1} parent=1 // pred_check
      _
    $region31: #{autoencoder_forward.1} parent=1 // pred_check_branch
      %34 = sbr.rel (0) target = $region33
    $region32: #{autoencoder_forward.1} parent=1 // pred_region
      _
    $region33: #{autoencoder_forward.1} parent=1 // pred_fallthru
      _
    // Predicated region
    $region34: #{autoencoder_forward.1} parent=1 // pred_check
      _
    $region35: #{autoencoder_forward.1} parent=1 // pred_check_branch
      %36 = sbr.rel (0) target = $region37
    $region36: #{autoencoder_forward.1} parent=1 // pred_region
      _
    $region37: #{autoencoder_forward.1} parent=1 // pred_fallthru
      _
    // Predicated region
    $region38: #{autoencoder_forward.1} parent=1 // pred_check
      _
    $region39: #{autoencoder_forward.1} parent=1 // pred_check_branch
      %38 = sbr.rel (0) target = $region41
    $region40: #{autoencoder_forward.1} parent=1 // pred_region
      _
    $region41: #{autoencoder_forward.1} parent=1 // pred_fallthru
      _
    // Predicated region
    $region42: #{autoencoder_forward.1} parent=1 // pred_check
      _
    $region43: #{autoencoder_forward.1} parent=1 // pred_check_branch
      %40 = sbr.rel (0) target = $region45
    $region44: #{autoencoder_forward.1} parent=1 // pred_region
      _
    $region45: #{autoencoder_forward.1} parent=1 // pred_fallthru
      _
    // Predicated region
    $region46: #{autoencoder_forward.1} parent=1 // pred_check
      _
    $region47: #{autoencoder_forward.1} parent=1 // pred_check_branch
      %42 = sbr.rel (0) target = $region49
    $region48: #{autoencoder_forward.1} parent=1 // pred_region
      _
    $region49: #{autoencoder_forward.1} parent=1 // pred_fallthru
      _
    // Predicated region
    $region50: #{autoencoder_forward.1} parent=1 // pred_check
      _
    $region51: #{autoencoder_forward.1} parent=1 // pred_check_branch
      %44 = sbr.rel (0) target = $region53
    $region52: #{autoencoder_forward.1} parent=1 // pred_region
      _
    $region53: #{autoencoder_forward.1} parent=1 // pred_fallthru
      _
    %v45 = vld [vmem:[%s0] sm:$0xff]
    %v46 = vld [vmem:[%s0 + $0x8] sm:$0xff]
    %v47 = vld [vmem:[%s1] sm:$0xff]
    %v48 = vld [vmem:[%s1 + $0x8] sm:$0xff]
    %v49 = vld [vmem:[%s1 + $0x10] sm:$0xff]
    %v50 = vld [vmem:[%s1 + $0x18] sm:$0xff]
    %v51 = vld [vmem:[%s2] sm:$0x1]
    %v53 = vlaneseq
    %v54 = vshrl.u32 %v53, 7
    %v55 = vsub.s32 0, %v54
    %v56 = vrot.slane %v51, %v55
    %vm58 = vcmask 261120
    %v60 = vsel %vm58, %v45, 0
    %v63 = vsel %vm58, %v46, 0
    %65 = vmatprep.subr.mxu0 0.0
    %66 = vmatpush1.msra.mxu0 0.0
    %67 = vmatprep.subr.mxu0 0.0
    %68 = vmatpush1.msra.mxu0 0.0
    %69 = vmatprep.subr.mxu0 0.0
    %70 = vmatpush1.msra.mxu0 0.0
    %71 = vmatprep.subr.mxu0 0.0
    %72 = vmatpush1.msra.mxu0 0.0
    %73 = vmatprep.subr.mxu0 0.0
    %74 = vmatpush1.msra.mxu0 0.0
    %75 = vmatprep.subr.mxu0 0.0
    %76 = vmatpush1.msra.mxu0 0.0
    %77 = vmatprep.subr.mxu0 0.0
    %78 = vmatpush1.msra.mxu0 0.0
    %79 = vmatprep.subr.mxu0 0.0
    %80 = vmatpush1.msra.mxu0 0.0
    %81 = vmatprep.subr.mxu0 0.0
    %82 = vmatpush1.msra.mxu0 0.0
    %83 = vmatprep.subr.mxu0 0.0
    %84 = vmatpush1.msra.mxu0 0.0
    %85 = vmatprep.subr.mxu0 0.0
    %86 = vmatpush1.msra.mxu0 0.0
    %87 = vmatprep.subr.mxu0 0.0
    %88 = vmatpush1.msra.mxu0 0.0
    %89 = vmatprep.subr.mxu0 0.0
    %90 = vmatpush1.msra.mxu0 %v50
    %91 = vmatprep.subr.mxu0 0.0
    %92 = vmatpush1.msra.mxu0 %v49
    %93 = vmatprep.subr.mxu0 0.0
    %94 = vmatpush1.msra.mxu0 %v48
    %95 = vmatprep.subr.mxu0 0.0
    %96 = vmatpush1.msra.mxu0 %v47
    %97 = vmatprep.subr.mxu0 0.0
    %98 = vmatpush2.msra.mxu0 0.0
    %99 = vmatprep.subr.mxu0 0.0
    %100 = vmatpush2.msra.mxu0 0.0
    %101 = vmatprep.subr.mxu0 0.0
    %102 = vmatpush2.msra.mxu0 0.0
    %103 = vmatprep.subr.mxu0 0.0
    %104 = vmatpush2.msra.mxu0 0.0
    %105 = vmatprep.subr.mxu0 0.0
    %106 = vmatpush2.msra.mxu0 0.0
    %107 = vmatprep.subr.mxu0 0.0
    %108 = vmatpush2.msra.mxu0 0.0
    %109 = vmatprep.subr.mxu0 0.0
    %110 = vmatpush2.msra.mxu0 0.0
    %111 = vmatprep.subr.mxu0 0.0
    %112 = vmatpush2.msra.mxu0 0.0
    %113 = vmatprep.subr.mxu0 0.0
    %114 = vmatpush2.msra.mxu0 0.0
    %115 = vmatprep.subr.mxu0 0.0
    %116 = vmatpush2.msra.mxu0 0.0
    %117 = vmatprep.subr.mxu0 0.0
    %118 = vmatpush2.msra.mxu0 0.0
    %119 = vmatprep.subr.mxu0 0.0
    %120 = vmatpush2.msra.mxu0 0.0
    %121 = vmatprep.subr.mxu0 0.0
    %122 = vmatpush2.msra.mxu0 0.0
    %123 = vmatprep.subr.mxu0 0.0
    %124 = vmatpush2.msra.mxu0 0.0
    %125 = vmatprep.subr.mxu0 0.0
    %126 = vmatpush2.msra.mxu0 0.0
    %127 = vmatprep.subr.mxu0 0.0
    %128 = vmatpush2.msra.mxu0 0.0
    %129 = vmatprep.mubr.f32.mxu0 0.0
    %130 = vmatmul.mubr.f32.gmra.mxu0 %v60
    %v131 = vpop.f32.mrf.mxu0
    %v132 = vadd.f32 %v56, %v131
    %v133 = vpop.f32.mrf.mxu0
    %134 = vmatprep.mubr.f32.mxu0 0.0
    %135 = vmatmul.mubr.f32.gmra.mxu0 %v63
    %v136 = vpop.f32.mrf.mxu0
    %v137 = vadd.f32 %v56, %v136
    %v138 = vpop.f32.mrf.mxu0
    %139 = vdwg.mxu0
    %v140 = vtanh.pop %v132
    %v141 = vtanh.pop %v137
    %v142 = vld [vmem:[%s3] sm:$0xff]
    %v143 = vld [vmem:[%s3 + $0x8] sm:$0xff]
    %v144 = vld [vmem:[%s3 + $0x10] sm:$0xff]
    %v145 = vld [vmem:[%s3 + $0x18] sm:$0xff]
    %v146 = vld [vmem:[%s3 + $0x20] sm:$0xff]
    %v147 = vld [vmem:[%s3 + $0x28] sm:$0xff]
    %v148 = vld [vmem:[%s3 + $0x30] sm:$0xff]
    %v149 = vld [vmem:[%s3 + $0x38] sm:$0xff]
    %v150 = vld [vmem:[%s3 + $0x40] sm:$0xff]
    %v151 = vld [vmem:[%s3 + $0x48] sm:$0xff]
    %v152 = vld [vmem:[%s3 + $0x50] sm:$0xff]
    %v153 = vld [vmem:[%s3 + $0x58] sm:$0xff]
    %v154 = vld [vmem:[%s3 + $0x60] sm:$0xff]
    %v155 = vld [vmem:[%s3 + $0x68] sm:$0xff]
    %v156 = vld [vmem:[%s3 + $0x70] sm:$0xff]
    %v157 = vld [vmem:[%s3 + $0x78] sm:$0xff]
    %v158 = vld [vmem:[%s4] sm:$0x1]
    %v160 = vlaneseq
    %v161 = vshrl.u32 %v160, 7
    %v162 = vsub.s32 0, %v161
    %v163 = vrot.slane %v158, %v162
    %165 = vmatprep.subr.mxu0 0.0
    %166 = vmatpush1.msra.mxu0 %v157
    %167 = vmatprep.subr.mxu0 0.0
    %168 = vmatpush1.msra.mxu0 %v156
    %169 = vmatprep.subr.mxu0 0.0
    %170 = vmatpush1.msra.mxu0 %v155
    %171 = vmatprep.subr.mxu0 0.0
    %172 = vmatpush1.msra.mxu0 %v154
    %173 = vmatprep.subr.mxu0 0.0
    %174 = vmatpush1.msra.mxu0 %v153
    %175 = vmatprep.subr.mxu0 0.0
    %176 = vmatpush1.msra.mxu0 %v152
    %177 = vmatprep.subr.mxu0 0.0
    %178 = vmatpush1.msra.mxu0 %v151
    %179 = vmatprep.subr.mxu0 0.0
    %180 = vmatpush1.msra.mxu0 %v150
    %181 = vmatprep.subr.mxu0 0.0
    %182 = vmatpush1.msra.mxu0 %v149
    %183 = vmatprep.subr.mxu0 0.0
    %184 = vmatpush1.msra.mxu0 %v148
    %185 = vmatprep.subr.mxu0 0.0
    %186 = vmatpush1.msra.mxu0 %v147
    %187 = vmatprep.subr.mxu0 0.0
    %188 = vmatpush1.msra.mxu0 %v146
    %189 = vmatprep.subr.mxu0 0.0
    %190 = vmatpush1.msra.mxu0 %v145
    %191 = vmatprep.subr.mxu0 0.0
    %192 = vmatpush1.msra.mxu0 %v144
    %193 = vmatprep.subr.mxu0 0.0
    %194 = vmatpush1.msra.mxu0 %v143
    %195 = vmatprep.subr.mxu0 0.0
    %196 = vmatpush1.msra.mxu0 %v142
    %197 = vmatprep.subr.mxu0 0.0
    %198 = vmatpush2.msra.mxu0 0.0
    %199 = vmatprep.subr.mxu0 0.0
    %200 = vmatpush2.msra.mxu0 0.0
    %201 = vmatprep.subr.mxu0 0.0
    %202 = vmatpush2.msra.mxu0 0.0
    %203 = vmatprep.subr.mxu0 0.0
    %204 = vmatpush2.msra.mxu0 0.0
    %205 = vmatprep.subr.mxu0 0.0
    %206 = vmatpush2.msra.mxu0 0.0
    %207 = vmatprep.subr.mxu0 0.0
    %208 = vmatpush2.msra.mxu0 0.0
    %209 = vmatprep.subr.mxu0 0.0
    %210 = vmatpush2.msra.mxu0 0.0
    %211 = vmatprep.subr.mxu0 0.0
    %212 = vmatpush2.msra.mxu0 0.0
    %213 = vmatprep.subr.mxu0 0.0
    %214 = vmatpush2.msra.mxu0 0.0
    %215 = vmatprep.subr.mxu0 0.0
    %216 = vmatpush2.msra.mxu0 0.0
    %217 = vmatprep.subr.mxu0 0.0
    %218 = vmatpush2.msra.mxu0 0.0
    %219 = vmatprep.subr.mxu0 0.0
    %220 = vmatpush2.msra.mxu0 0.0
    %221 = vmatprep.subr.mxu0 0.0
    %222 = vmatpush2.msra.mxu0 0.0
    %223 = vmatprep.subr.mxu0 0.0
    %224 = vmatpush2.msra.mxu0 0.0
    %225 = vmatprep.subr.mxu0 0.0
    %226 = vmatpush2.msra.mxu0 0.0
    %227 = vmatprep.subr.mxu0 0.0
    %228 = vmatpush2.msra.mxu0 0.0
    %229 = vmatprep.mubr.f32.mxu0 0.0
    %230 = vmatmul.mubr.f32.gmra.mxu0 %v140
    %v231 = vpop.f32.mrf.mxu0
    %v232 = vadd.f32 %v163, %v231
    %v233 = vpop.f32.mrf.mxu0
    %234 = vmatprep.mubr.f32.mxu0 0.0
    %235 = vmatmul.mubr.f32.gmra.mxu0 %v141
    %v236 = vpop.f32.mrf.mxu0
    %v237 = vadd.f32 %v163, %v236
    %v238 = vpop.f32.mrf.mxu0
    %239 = vdwg.mxu0
    %v240 = vtanh.pop %v232
    %v241 = vtanh.pop %v237
    %v242 = vld [vmem:[%s5] sm:$0xff]
    %v243 = vld [vmem:[%s5 + $0x8] sm:$0xff]
    %v244 = vld [vmem:[%s5 + $0x10] sm:$0xff]
    %v245 = vld [vmem:[%s5 + $0x18] sm:$0xff]
    %v246 = vld [vmem:[%s5 + $0x20] sm:$0xff]
    %v247 = vld [vmem:[%s5 + $0x28] sm:$0xff]
    %v248 = vld [vmem:[%s5 + $0x30] sm:$0xff]
    %v249 = vld [vmem:[%s5 + $0x38] sm:$0xff]
    %v250 = vld [vmem:[%s5 + $0x40] sm:$0xff]
    %v251 = vld [vmem:[%s5 + $0x48] sm:$0xff]
    %v252 = vld [vmem:[%s5 + $0x50] sm:$0xff]
    %v253 = vld [vmem:[%s5 + $0x58] sm:$0xff]
    %v254 = vld [vmem:[%s5 + $0x60] sm:$0xff]
    %v255 = vld [vmem:[%s5 + $0x68] sm:$0xff]
    %v256 = vld [vmem:[%s5 + $0x70] sm:$0xff]
    %v257 = vld [vmem:[%s5 + $0x78] sm:$0xff]
    %v258 = vld [vmem:[%s6] sm:$0x1]
    %v260 = vlaneseq
    %v261 = vshrl.u32 %v260, 7
    %v262 = vsub.s32 0, %v261
    %v263 = vrot.slane %v258, %v262
    %265 = vmatprep.subr.mxu0 0.0
    %266 = vmatpush1.msra.mxu0 %v257
    %267 = vmatprep.subr.mxu0 0.0
    %268 = vmatpush1.msra.mxu0 %v256
    %269 = vmatprep.subr.mxu0 0.0
    %270 = vmatpush1.msra.mxu0 %v255
    %271 = vmatprep.subr.mxu0 0.0
    %272 = vmatpush1.msra.mxu0 %v254
    %273 = vmatprep.subr.mxu0 0.0
    %274 = vmatpush1.msra.mxu0 %v253
    %275 = vmatprep.subr.mxu0 0.0
    %276 = vmatpush1.msra.mxu0 %v252
    %277 = vmatprep.subr.mxu0 0.0
    %278 = vmatpush1.msra.mxu0 %v251
    %279 = vmatprep.subr.mxu0 0.0
    %280 = vmatpush1.msra.mxu0 %v250
    %281 = vmatprep.subr.mxu0 0.0
    %282 = vmatpush1.msra.mxu0 %v249
    %283 = vmatprep.subr.mxu0 0.0
    %284 = vmatpush1.msra.mxu0 %v248
    %285 = vmatprep.subr.mxu0 0.0
    %286 = vmatpush1.msra.mxu0 %v247
    %287 = vmatprep.subr.mxu0 0.0
    %288 = vmatpush1.msra.mxu0 %v246
    %289 = vmatprep.subr.mxu0 0.0
    %290 = vmatpush1.msra.mxu0 %v245
    %291 = vmatprep.subr.mxu0 0.0
    %292 = vmatpush1.msra.mxu0 %v244
    %293 = vmatprep.subr.mxu0 0.0
    %294 = vmatpush1.msra.mxu0 %v243
    %295 = vmatprep.subr.mxu0 0.0
    %296 = vmatpush1.msra.mxu0 %v242
    %297 = vmatprep.subr.mxu0 0.0
    %298 = vmatpush2.msra.mxu0 0.0
    %299 = vmatprep.subr.mxu0 0.0
    %300 = vmatpush2.msra.mxu0 0.0
    %301 = vmatprep.subr.mxu0 0.0
    %302 = vmatpush2.msra.mxu0 0.0
    %303 = vmatprep.subr.mxu0 0.0
    %304 = vmatpush2.msra.mxu0 0.0
    %305 = vmatprep.subr.mxu0 0.0
    %306 = vmatpush2.msra.mxu0 0.0
    %307 = vmatprep.subr.mxu0 0.0
    %308 = vmatpush2.msra.mxu0 0.0
    %309 = vmatprep.subr.mxu0 0.0
    %310 = vmatpush2.msra.mxu0 0.0
    %311 = vmatprep.subr.mxu0 0.0
    %312 = vmatpush2.msra.mxu0 0.0
    %313 = vmatprep.subr.mxu0 0.0
    %314 = vmatpush2.msra.mxu0 0.0
    %315 = vmatprep.subr.mxu0 0.0
    %316 = vmatpush2.msra.mxu0 0.0
    %317 = vmatprep.subr.mxu0 0.0
    %318 = vmatpush2.msra.mxu0 0.0
    %319 = vmatprep.subr.mxu0 0.0
    %320 = vmatpush2.msra.mxu0 0.0
    %321 = vmatprep.subr.mxu0 0.0
    %322 = vmatpush2.msra.mxu0 0.0
    %323 = vmatprep.subr.mxu0 0.0
    %324 = vmatpush2.msra.mxu0 0.0
    %325 = vmatprep.subr.mxu0 0.0
    %326 = vmatpush2.msra.mxu0 0.0
    %327 = vmatprep.subr.mxu0 0.0
    %328 = vmatpush2.msra.mxu0 0.0
    %329 = vmatprep.mubr.f32.mxu0 0.0
    %330 = vmatmul.mubr.f32.gmra.mxu0 %v240
    %v331 = vpop.f32.mrf.mxu0
    %v332 = vadd.f32 %v263, %v331
    %v333 = vpop.f32.mrf.mxu0
    %334 = vmatprep.mubr.f32.mxu0 0.0
    %335 = vmatmul.mubr.f32.gmra.mxu0 %v241
    %v336 = vpop.f32.mrf.mxu0
    %v337 = vadd.f32 %v263, %v336
    %v338 = vpop.f32.mrf.mxu0
    %339 = vdwg.mxu0
    %v340 = vmax.f32 %v332, 0.0
    %v341 = vmax.f32 %v337, 0.0
    %v342 = vld [vmem:[%s7] sm:$0xff]
    %v343 = vld [vmem:[%s7 + $0x8] sm:$0xff]
    %v344 = vld [vmem:[%s7 + $0x10] sm:$0xff]
    %v345 = vld [vmem:[%s7 + $0x18] sm:$0xff]
    %v346 = vld [vmem:[%s7 + $0x20] sm:$0xff]
    %v347 = vld [vmem:[%s7 + $0x28] sm:$0xff]
    %v348 = vld [vmem:[%s7 + $0x30] sm:$0xff]
    %v349 = vld [vmem:[%s7 + $0x38] sm:$0xff]
    %v350 = vld [vmem:[%s7 + $0x40] sm:$0xff]
    %v351 = vld [vmem:[%s7 + $0x48] sm:$0xff]
    %v352 = vld [vmem:[%s7 + $0x50] sm:$0xff]
    %v353 = vld [vmem:[%s7 + $0x58] sm:$0xff]
    %v354 = vld [vmem:[%s7 + $0x60] sm:$0xff]
    %v355 = vld [vmem:[%s7 + $0x68] sm:$0xff]
    %v356 = vld [vmem:[%s7 + $0x70] sm:$0xff]
    %v357 = vld [vmem:[%s7 + $0x78] sm:$0xff]
    %v358 = vld [vmem:[%s8] sm:$0x1]
    %v360 = vlaneseq
    %v361 = vshrl.u32 %v360, 7
    %v362 = vsub.s32 0, %v361
    %v363 = vrot.slane %v358, %v362
    %365 = vmatprep.subr.mxu0 0.0
    %366 = vmatpush1.msra.mxu0 %v357
    %367 = vmatprep.subr.mxu0 0.0
    %368 = vmatpush1.msra.mxu0 %v356
    %369 = vmatprep.subr.mxu0 0.0
    %370 = vmatpush1.msra.mxu0 %v355
    %371 = vmatprep.subr.mxu0 0.0
    %372 = vmatpush1.msra.mxu0 %v354
    %373 = vmatprep.subr.mxu0 0.0
    %374 = vmatpush1.msra.mxu0 %v353
    %375 = vmatprep.subr.mxu0 0.0
    %376 = vmatpush1.msra.mxu0 %v352
    %377 = vmatprep.subr.mxu0 0.0
    %378 = vmatpush1.msra.mxu0 %v351
    %379 = vmatprep.subr.mxu0 0.0
    %380 = vmatpush1.msra.mxu0 %v350
    %381 = vmatprep.subr.mxu0 0.0
    %382 = vmatpush1.msra.mxu0 %v349
    %383 = vmatprep.subr.mxu0 0.0
    %384 = vmatpush1.msra.mxu0 %v348
    %385 = vmatprep.subr.mxu0 0.0
    %386 = vmatpush1.msra.mxu0 %v347
    %387 = vmatprep.subr.mxu0 0.0
    %388 = vmatpush1.msra.mxu0 %v346
    %389 = vmatprep.subr.mxu0 0.0
    %390 = vmatpush1.msra.mxu0 %v345
    %391 = vmatprep.subr.mxu0 0.0
    %392 = vmatpush1.msra.mxu0 %v344
    %393 = vmatprep.subr.mxu0 0.0
    %394 = vmatpush1.msra.mxu0 %v343
    %395 = vmatprep.subr.mxu0 0.0
    %396 = vmatpush1.msra.mxu0 %v342
    %397 = vmatprep.subr.mxu0 0.0
    %398 = vmatpush2.msra.mxu0 0.0
    %399 = vmatprep.subr.mxu0 0.0
    %400 = vmatpush2.msra.mxu0 0.0
    %401 = vmatprep.subr.mxu0 0.0
    %402 = vmatpush2.msra.mxu0 0.0
    %403 = vmatprep.subr.mxu0 0.0
    %404 = vmatpush2.msra.mxu0 0.0
    %405 = vmatprep.subr.mxu0 0.0
    %406 = vmatpush2.msra.mxu0 0.0
    %407 = vmatprep.subr.mxu0 0.0
    %408 = vmatpush2.msra.mxu0 0.0
    %409 = vmatprep.subr.mxu0 0.0
    %410 = vmatpush2.msra.mxu0 0.0
    %411 = vmatprep.subr.mxu0 0.0
    %412 = vmatpush2.msra.mxu0 0.0
    %413 = vmatprep.subr.mxu0 0.0
    %414 = vmatpush2.msra.mxu0 0.0
    %415 = vmatprep.subr.mxu0 0.0
    %416 = vmatpush2.msra.mxu0 0.0
    %417 = vmatprep.subr.mxu0 0.0
    %418 = vmatpush2.msra.mxu0 0.0
    %419 = vmatprep.subr.mxu0 0.0
    %420 = vmatpush2.msra.mxu0 0.0
    %421 = vmatprep.subr.mxu0 0.0
    %422 = vmatpush2.msra.mxu0 0.0
    %423 = vmatprep.subr.mxu0 0.0
    %424 = vmatpush2.msra.mxu0 0.0
    %425 = vmatprep.subr.mxu0 0.0
    %426 = vmatpush2.msra.mxu0 0.0
    %427 = vmatprep.subr.mxu0 0.0
    %428 = vmatpush2.msra.mxu0 0.0
    %429 = vmatprep.mubr.f32.mxu0 0.0
    %430 = vmatmul.mubr.f32.gmra.mxu0 %v340
    %v431 = vpop.f32.mrf.mxu0
    %v432 = vadd.f32 %v363, %v431
    %v433 = vpop.f32.mrf.mxu0
    %434 = vmatprep.mubr.f32.mxu0 0.0
    %435 = vmatmul.mubr.f32.gmra.mxu0 %v341
    %v436 = vpop.f32.mrf.mxu0
    %v437 = vadd.f32 %v363, %v436
    %v438 = vpop.f32.mrf.mxu0
    %439 = vdwg.mxu0
    %v440 = vtanh.pop %v432
    %v441 = vtanh.pop %v437
    %v442 = vld [vmem:[%s9] sm:$0xff]
    %v443 = vld [vmem:[%s9 + $0x8] sm:$0xff]
    %v444 = vld [vmem:[%s9 + $0x10] sm:$0xff]
    %v445 = vld [vmem:[%s9 + $0x18] sm:$0xff]
    %v446 = vld [vmem:[%s9 + $0x20] sm:$0xff]
    %v447 = vld [vmem:[%s9 + $0x28] sm:$0xff]
    %v448 = vld [vmem:[%s9 + $0x30] sm:$0xff]
    %v449 = vld [vmem:[%s9 + $0x38] sm:$0xff]
    %v450 = vld [vmem:[%s9 + $0x40] sm:$0xff]
    %v451 = vld [vmem:[%s9 + $0x48] sm:$0xff]
    %v452 = vld [vmem:[%s9 + $0x50] sm:$0xff]
    %v453 = vld [vmem:[%s9 + $0x58] sm:$0xff]
    %v454 = vld [vmem:[%s9 + $0x60] sm:$0xff]
    %v455 = vld [vmem:[%s9 + $0x68] sm:$0xff]
    %v456 = vld [vmem:[%s9 + $0x70] sm:$0xff]
    %v457 = vld [vmem:[%s9 + $0x78] sm:$0xff]
    %v458 = vld [vmem:[%s10] sm:$0x1]
    %v460 = vlaneseq
    %v461 = vshrl.u32 %v460, 7
    %v462 = vsub.s32 0, %v461
    %v463 = vrot.slane %v458, %v462
    %465 = vmatprep.subr.mxu0 0.0
    %466 = vmatpush1.msra.mxu0 %v457
    %467 = vmatprep.subr.mxu0 0.0
    %468 = vmatpush1.msra.mxu0 %v456
    %469 = vmatprep.subr.mxu0 0.0
    %470 = vmatpush1.msra.mxu0 %v455
    %471 = vmatprep.subr.mxu0 0.0
    %472 = vmatpush1.msra.mxu0 %v454
    %473 = vmatprep.subr.mxu0 0.0
    %474 = vmatpush1.msra.mxu0 %v453
    %475 = vmatprep.subr.mxu0 0.0
    %476 = vmatpush1.msra.mxu0 %v452
    %477 = vmatprep.subr.mxu0 0.0
    %478 = vmatpush1.msra.mxu0 %v451
    %479 = vmatprep.subr.mxu0 0.0
    %480 = vmatpush1.msra.mxu0 %v450
    %481 = vmatprep.subr.mxu0 0.0
    %482 = vmatpush1.msra.mxu0 %v449
    %483 = vmatprep.subr.mxu0 0.0
    %484 = vmatpush1.msra.mxu0 %v448
    %485 = vmatprep.subr.mxu0 0.0
    %486 = vmatpush1.msra.mxu0 %v447
    %487 = vmatprep.subr.mxu0 0.0
    %488 = vmatpush1.msra.mxu0 %v446
    %489 = vmatprep.subr.mxu0 0.0
    %490 = vmatpush1.msra.mxu0 %v445
    %491 = vmatprep.subr.mxu0 0.0
    %492 = vmatpush1.msra.mxu0 %v444
    %493 = vmatprep.subr.mxu0 0.0
    %494 = vmatpush1.msra.mxu0 %v443
    %495 = vmatprep.subr.mxu0 0.0
    %496 = vmatpush1.msra.mxu0 %v442
    %497 = vmatprep.subr.mxu0 0.0
    %498 = vmatpush2.msra.mxu0 0.0
    %499 = vmatprep.subr.mxu0 0.0
    %500 = vmatpush2.msra.mxu0 0.0
    %501 = vmatprep.subr.mxu0 0.0
    %502 = vmatpush2.msra.mxu0 0.0
    %503 = vmatprep.subr.mxu0 0.0
    %504 = vmatpush2.msra.mxu0 0.0
    %505 = vmatprep.subr.mxu0 0.0
    %506 = vmatpush2.msra.mxu0 0.0
    %507 = vmatprep.subr.mxu0 0.0
    %508 = vmatpush2.msra.mxu0 0.0
    %509 = vmatprep.subr.mxu0 0.0
    %510 = vmatpush2.msra.mxu0 0.0
    %511 = vmatprep.subr.mxu0 0.0
    %512 = vmatpush2.msra.mxu0 0.0
    %513 = vmatprep.subr.mxu0 0.0
    %514 = vmatpush2.msra.mxu0 0.0
    %515 = vmatprep.subr.mxu0 0.0
    %516 = vmatpush2.msra.mxu0 0.0
    %517 = vmatprep.subr.mxu0 0.0
    %518 = vmatpush2.msra.mxu0 0.0
    %519 = vmatprep.subr.mxu0 0.0
    %520 = vmatpush2.msra.mxu0 0.0
    %521 = vmatprep.subr.mxu0 0.0
    %522 = vmatpush2.msra.mxu0 0.0
    %523 = vmatprep.subr.mxu0 0.0
    %524 = vmatpush2.msra.mxu0 0.0
    %525 = vmatprep.subr.mxu0 0.0
    %526 = vmatpush2.msra.mxu0 0.0
    %527 = vmatprep.subr.mxu0 0.0
    %528 = vmatpush2.msra.mxu0 0.0
    %529 = vmatprep.mubr.f32.mxu0 0.0
    %530 = vmatmul.mubr.f32.gmra.mxu0 %v440
    %v531 = vpop.f32.mrf.mxu0
    %v532 = vadd.f32 %v463, %v531
    %v533 = vpop.f32.mrf.mxu0
    %534 = vmatprep.mubr.f32.mxu0 0.0
    %535 = vmatmul.mubr.f32.gmra.mxu0 %v441
    %v536 = vpop.f32.mrf.mxu0
    %v537 = vadd.f32 %v463, %v536
    %v538 = vpop.f32.mrf.mxu0
    %539 = vdwg.mxu0
    %v540 = vtanh.pop %v532
    %v541 = vtanh.pop %v537
    %v542 = vld [vmem:[%s11] sm:$0xff]
    %v543 = vld [vmem:[%s11 + $0x8] sm:$0xff]
    %v544 = vld [vmem:[%s11 + $0x10] sm:$0xff]
    %v545 = vld [vmem:[%s11 + $0x18] sm:$0xff]
    %v546 = vld [vmem:[%s11 + $0x20] sm:$0xff]
    %v547 = vld [vmem:[%s11 + $0x28] sm:$0xff]
    %v548 = vld [vmem:[%s11 + $0x30] sm:$0xff]
    %v549 = vld [vmem:[%s11 + $0x38] sm:$0xff]
    %v550 = vld [vmem:[%s11 + $0x40] sm:$0xff]
    %v551 = vld [vmem:[%s11 + $0x48] sm:$0xff]
    %v552 = vld [vmem:[%s11 + $0x50] sm:$0xff]
    %v553 = vld [vmem:[%s11 + $0x58] sm:$0xff]
    %v554 = vld [vmem:[%s11 + $0x60] sm:$0xff]
    %v555 = vld [vmem:[%s11 + $0x68] sm:$0xff]
    %v556 = vld [vmem:[%s11 + $0x70] sm:$0xff]
    %v557 = vld [vmem:[%s11 + $0x78] sm:$0xff]
    %v558 = vld [vmem:[%s12] sm:$0x1]
    %v560 = vlaneseq
    %v561 = vshrl.u32 %v560, 7
    %v562 = vsub.s32 0, %v561
    %v563 = vrot.slane %v558, %v562
    %565 = vmatprep.subr.mxu0 0.0
    %566 = vmatpush1.msra.mxu0 %v557
    %567 = vmatprep.subr.mxu0 0.0
    %568 = vmatpush1.msra.mxu0 %v556
    %569 = vmatprep.subr.mxu0 0.0
    %570 = vmatpush1.msra.mxu0 %v555
    %571 = vmatprep.subr.mxu0 0.0
    %572 = vmatpush1.msra.mxu0 %v554
    %573 = vmatprep.subr.mxu0 0.0
    %574 = vmatpush1.msra.mxu0 %v553
    %575 = vmatprep.subr.mxu0 0.0
    %576 = vmatpush1.msra.mxu0 %v552
    %577 = vmatprep.subr.mxu0 0.0
    %578 = vmatpush1.msra.mxu0 %v551
    %579 = vmatprep.subr.mxu0 0.0
    %580 = vmatpush1.msra.mxu0 %v550
    %581 = vmatprep.subr.mxu0 0.0
    %582 = vmatpush1.msra.mxu0 %v549
    %583 = vmatprep.subr.mxu0 0.0
    %584 = vmatpush1.msra.mxu0 %v548
    %585 = vmatprep.subr.mxu0 0.0
    %586 = vmatpush1.msra.mxu0 %v547
    %587 = vmatprep.subr.mxu0 0.0
    %588 = vmatpush1.msra.mxu0 %v546
    %589 = vmatprep.subr.mxu0 0.0
    %590 = vmatpush1.msra.mxu0 %v545
    %591 = vmatprep.subr.mxu0 0.0
    %592 = vmatpush1.msra.mxu0 %v544
    %593 = vmatprep.subr.mxu0 0.0
    %594 = vmatpush1.msra.mxu0 %v543
    %595 = vmatprep.subr.mxu0 0.0
    %596 = vmatpush1.msra.mxu0 %v542
    %597 = vmatprep.subr.mxu0 0.0
    %598 = vmatpush2.msra.mxu0 0.0
    %599 = vmatprep.subr.mxu0 0.0
    %600 = vmatpush2.msra.mxu0 0.0
    %601 = vmatprep.subr.mxu0 0.0
    %602 = vmatpush2.msra.mxu0 0.0
    %603 = vmatprep.subr.mxu0 0.0
    %604 = vmatpush2.msra.mxu0 0.0
    %605 = vmatprep.subr.mxu0 0.0
    %606 = vmatpush2.msra.mxu0 0.0
    %607 = vmatprep.subr.mxu0 0.0
    %608 = vmatpush2.msra.mxu0 0.0
    %609 = vmatprep.subr.mxu0 0.0
    %610 = vmatpush2.msra.mxu0 0.0
    %611 = vmatprep.subr.mxu0 0.0
    %612 = vmatpush2.msra.mxu0 0.0
    %613 = vmatprep.subr.mxu0 0.0
    %614 = vmatpush2.msra.mxu0 0.0
    %615 = vmatprep.subr.mxu0 0.0
    %616 = vmatpush2.msra.mxu0 0.0
    %617 = vmatprep.subr.mxu0 0.0
    %618 = vmatpush2.msra.mxu0 0.0
    %619 = vmatprep.subr.mxu0 0.0
    %620 = vmatpush2.msra.mxu0 0.0
    %621 = vmatprep.subr.mxu0 0.0
    %622 = vmatpush2.msra.mxu0 0.0
    %623 = vmatprep.subr.mxu0 0.0
    %624 = vmatpush2.msra.mxu0 0.0
    %625 = vmatprep.subr.mxu0 0.0
    %626 = vmatpush2.msra.mxu0 0.0
    %627 = vmatprep.subr.mxu0 0.0
    %628 = vmatpush2.msra.mxu0 0.0
    %629 = vmatprep.mubr.f32.mxu0 0.0
    %630 = vmatmul.mubr.f32.gmra.mxu0 %v540
    %v631 = vpop.f32.mrf.mxu0
    %v632 = vadd.f32 %v563, %v631
    %v633 = vpop.f32.mrf.mxu0
    %634 = vmatprep.mubr.f32.mxu0 0.0
    %635 = vmatmul.mubr.f32.gmra.mxu0 %v541
    %v636 = vpop.f32.mrf.mxu0
    %v637 = vadd.f32 %v563, %v636
    %v638 = vpop.f32.mrf.mxu0
    %639 = vdwg.mxu0
    %640 = vst [vmem:[#allocation2] sm:$0xff] %v632
    %641 = vst [vmem:[#allocation2 + $0x8] sm:$0xff] %v637
    // Predicated region
    $region54: #{autoencoder_forward.1} parent=1 // pred_check
      _
    $region55: #{autoencoder_forward.1} parent=1 // pred_check_branch
      %643 = sbr.rel (0) target = $region57
    $region56: #{autoencoder_forward.1} parent=1 // pred_region
      %s645 = ssub.s32 256, 256
      %646 = vsyncadd [#allocation3], %s645
      %s647 = sshll.u32 [#allocation2], 4
      %s648 = int_to_ptr.vmem [resolvable:$true] %s647
      %653 = dma.vmem_to_hbm [thread:$0]  %s648, 256, %s13, [#allocation3], 128, 128, 8
    $region57: #{autoencoder_forward.1} parent=1 // pred_fallthru
      _
    // Predicated region
    $region58: #{autoencoder_forward.1} parent=1 // pred_check
      _
    $region59: #{autoencoder_forward.1} parent=1 // pred_check_branch
      %655 = sbr.rel (0) target = $region61
    $region60: #{autoencoder_forward.1} parent=1 // pred_region
      %656 = dma.done [#allocation3], 256
    $region61: #{autoencoder_forward.1} parent=1 // pred_fallthru
      _
    %657 = vsyncpa [#allocation3], 1

</llo_original>
